<compile_context>
chip_gen: v6e
topology: v6e:2x2x1
jax: 0.10.0
libtpu: 0.0.40
codegen_flags: <defaults>
</compile_context>

<pallas_src>
import functools

import jax
import jax.numpy as jnp
from jax.experimental import pallas as pl
from jax.experimental.pallas import tpu as pltpu


def _pixel_unshuffle_kernel(x_ref, o_ref, t_ref, c_ref, *, k, H, W, cblk):
    # x_ref: (1, cblk, H*k, W*k)      block of input channel planes
    # o_ref: (1, cblk*k*k, H, W)      corresponding output channel planes
    # t_ref: VMEM scratch (W*k, H*k)  transposed input plane
    # c_ref: VMEM scratch (H*k, W)    one column-subsampled plane
    for c in range(cblk):
        # One XLU transpose per plane: turns the column (lane) subsampling
        # below into a cheap sublane-strided load.
        t_ref[...] = jnp.swapaxes(x_ref[0, c], 0, 1)            # (Wk, Hk)
        for xx in range(k):
            # columns xx::k of the original plane (still transposed): (W, Hk)
            col_t = t_ref[pl.ds(xx, W, stride=k), :]
            c_ref[...] = jnp.swapaxes(col_t, 0, 1)              # (Hk, W)
            for yy in range(k):
                # rows yy::k -> the (yy, xx) output plane, stored directly.
                o_ref[0, c * k * k + yy * k + xx] = (
                    c_ref[pl.ds(yy, H, stride=k), :]            # (H, W)
                )


def pixel_unshuffle(x, downscale_factor):
    k = int(downscale_factor)
    B, C, Hk, Wk = x.shape
    assert Hk % k == 0 and Wk % k == 0, "spatial dims must be divisible by k"
    H, W = Hk // k, Wk // k

    itemsize = jnp.dtype(x.dtype).itemsize

    # Block several input channels per grid step (divisor of C) so each step
    # moves a reasonably sized tile; cap the per-step input tile at ~2 MiB so
    # double-buffered in+out blocks comfortably fit v7x's smaller VMEM budget.
    cblk = 1
    for d in range(1, C + 1):
        if C % d == 0 and d * Hk * Wk * itemsize <= (2 << 20):
            cblk = d

    kernel = functools.partial(_pixel_unshuffle_kernel, k=k, H=H, W=W, cblk=cblk)

    nbytes = x.size * itemsize  # read once + written once
    out = pl.pallas_call(
        kernel,
        out_shape=jax.ShapeDtypeStruct((B, C * k * k, H, W), x.dtype),
        grid_spec=pltpu.PrefetchScalarGridSpec(
            num_scalar_prefetch=0,
            grid=(B, C // cblk),
            in_specs=[
                pl.BlockSpec((1, cblk, Hk, Wk), lambda b, cb: (b, cb, 0, 0)),
            ],
            out_specs=pl.BlockSpec(
                (1, cblk * k * k, H, W), lambda b, cb: (b, cb, 0, 0)
            ),
            scratch_shapes=[
                pltpu.VMEM((Wk, Hk), x.dtype),
                pltpu.VMEM((Hk, W), x.dtype),
            ],
        ),
        compiler_params=pltpu.CompilerParams(
            dimension_semantics=("parallel", "parallel")
        ),
        cost_estimate=pl.CostEstimate(
            flops=0, transcendentals=0, bytes_accessed=2 * nbytes
        ),
    )(x)
    return out


def pixel_unshuffle_ref(x, k):
    # Pure-JAX reference matching the PyTorch module (conv2d one-hot kernel):
    # out[b, c*k*k + y*k + x, h, w] = in[b, c, h*k + y, w*k + x]
    B, C, Hk, Wk = x.shape
    H, W = Hk // k, Wk // k
    y = x.reshape(B, C, H, k, W, k)
    y = jnp.transpose(y, (0, 1, 3, 5, 2, 4))
    return y.reshape(B, C * k * k, H, W)


if __name__ == "__main__":
    key = jax.random.PRNGKey(0)
    downscale = 2
    x = jax.random.normal(key, (2, 4, 16, 16), dtype=jnp.float32)  # (B, C, H*k, W*k)

    out = pixel_unshuffle(x, downscale)
    out = jax.block_until_ready(out)

    ref = pixel_unshuffle_ref(x, downscale)
    assert out.shape == (2, 16, 8, 8), out.shape
    assert out.dtype == x.dtype
    # Pure data movement -> must be bit-exact.
    assert bool(jnp.array_equal(out, ref)), "mismatch vs reference"

    print("KERNEL_OK")
</pallas_src>

<mosaic_0001>
module attributes {stable_mosaic.version = 11 : i64} {
  func.func @_pixel_unshuffle_kernel(%arg0: i32, %arg1: i32, %arg2: memref<1x4x16x16xf32, #tpu.memory_space<vmem>>, %arg3: memref<1x16x8x8xf32, #tpu.memory_space<vmem>>, %arg4: memref<16x16xf32, #tpu.memory_space<vmem>>, %arg5: memref<16x8xf32, #tpu.memory_space<vmem>>) attributes {dimension_semantics = [#tpu.dimension_semantics<parallel>, #tpu.dimension_semantics<parallel>], iteration_bounds = array<i64: 2, 1>, scalar_prefetch = 0 : i64, scratch_operands = 2 : i64, tpu.core_type = #tpu.core_type<tc>, window_params = [{transform_indices = @transform_0, window_bounds = array<i64: 1, 4, 16, 16>}, {transform_indices = @transform_1, window_bounds = array<i64: 1, 16, 8, 8>}]} {
    %c0 = arith.constant 0 : index
    %c0_0 = arith.constant 0 : index
    %c0_1 = arith.constant 0 : index
    %c0_2 = arith.constant 0 : index
    %0 = vector.load %arg2[%c0, %c0_0, %c0_1, %c0_2] : memref<1x4x16x16xf32, #tpu.memory_space<vmem>>, vector<1x1x16x16xf32>
    %1 = vector.shape_cast %0 : vector<1x1x16x16xf32> to vector<16x16xf32>
    %2 = tpu.transpose %1, [1, 0] : vector<16x16xf32> -> vector<16x16xf32>
    %c0_3 = arith.constant 0 : index
    %c0_4 = arith.constant 0 : index
    %3 = vector.load %arg4[%c0_3, %c0_4] : memref<16x16xf32, #tpu.memory_space<vmem>>, vector<16x16xf32>
    tpu.vector_store %arg4[%c0_3, %c0_4], %2 {strides = array<i32>} : memref<16x16xf32, #tpu.memory_space<vmem>>, vector<16x16xf32>,
    %c0_5 = arith.constant 0 : index
    %c0_6 = arith.constant 0 : index
    %4 = tpu.strided_load %arg4[%c0_5, %c0_6] {strides = array<i32: 2, 1>} : memref<16x16xf32, #tpu.memory_space<vmem>>, vector<8x16xf32>
    %5 = tpu.transpose %4, [1, 0] : vector<8x16xf32> -> vector<16x8xf32>
    %c0_7 = arith.constant 0 : index
    %c0_8 = arith.constant 0 : index
    %6 = vector.load %arg5[%c0_7, %c0_8] : memref<16x8xf32, #tpu.memory_space<vmem>>, vector<16x8xf32>
    tpu.vector_store %arg5[%c0_7, %c0_8], %5 {strides = array<i32>} : memref<16x8xf32, #tpu.memory_space<vmem>>, vector<16x8xf32>,
    %c0_9 = arith.constant 0 : index
    %c0_10 = arith.constant 0 : index
    %7 = tpu.strided_load %arg5[%c0_9, %c0_10] {strides = array<i32: 2, 1>} : memref<16x8xf32, #tpu.memory_space<vmem>>, vector<8x8xf32>
    %c0_11 = arith.constant 0 : index
    %c0_12 = arith.constant 0 : index
    %c0_13 = arith.constant 0 : index
    %c0_14 = arith.constant 0 : index
    %8 = vector.load %arg3[%c0_11, %c0_12, %c0_13, %c0_14] : memref<1x16x8x8xf32, #tpu.memory_space<vmem>>, vector<1x1x8x8xf32>
    %9 = vector.shape_cast %8 : vector<1x1x8x8xf32> to vector<8x8xf32>
    %10 = vector.shape_cast %7 : vector<8x8xf32> to vector<1x1x8x8xf32>
    tpu.vector_store %arg3[%c0_11, %c0_12, %c0_13, %c0_14], %10 {strides = array<i32>} : memref<1x16x8x8xf32, #tpu.memory_space<vmem>>, vector<1x1x8x8xf32>,
    %c1 = arith.constant 1 : index
    %c0_15 = arith.constant 0 : index
    %11 = tpu.strided_load %arg5[%c1, %c0_15] {strides = array<i32: 2, 1>} : memref<16x8xf32, #tpu.memory_space<vmem>>, vector<8x8xf32>
    %c0_16 = arith.constant 0 : index
    %c2 = arith.constant 2 : index
    %c0_17 = arith.constant 0 : index
    %c0_18 = arith.constant 0 : index
    %12 = vector.load %arg3[%c0_16, %c2, %c0_17, %c0_18] : memref<1x16x8x8xf32, #tpu.memory_space<vmem>>, vector<1x1x8x8xf32>
    %13 = vector.shape_cast %12 : vector<1x1x8x8xf32> to vector<8x8xf32>
    %14 = vector.shape_cast %11 : vector<8x8xf32> to vector<1x1x8x8xf32>
    tpu.vector_store %arg3[%c0_16, %c2, %c0_17, %c0_18], %14 {strides = array<i32>} : memref<1x16x8x8xf32, #tpu.memory_space<vmem>>, vector<1x1x8x8xf32>,
    %c1_19 = arith.constant 1 : index
    %c0_20 = arith.constant 0 : index
    %15 = tpu.strided_load %arg4[%c1_19, %c0_20] {strides = array<i32: 2, 1>} : memref<16x16xf32, #tpu.memory_space<vmem>>, vector<8x16xf32>
    %16 = tpu.transpose %15, [1, 0] : vector<8x16xf32> -> vector<16x8xf32>
    %c0_21 = arith.constant 0 : index
    %c0_22 = arith.constant 0 : index
    %17 = vector.load %arg5[%c0_21, %c0_22] : memref<16x8xf32, #tpu.memory_space<vmem>>, vector<16x8xf32>
    tpu.vector_store %arg5[%c0_21, %c0_22], %16 {strides = array<i32>} : memref<16x8xf32, #tpu.memory_space<vmem>>, vector<16x8xf32>,
    %c0_23 = arith.constant 0 : index
    %c0_24 = arith.constant 0 : index
    %18 = tpu.strided_load %arg5[%c0_23, %c0_24] {strides = array<i32: 2, 1>} : memref<16x8xf32, #tpu.memory_space<vmem>>, vector<8x8xf32>
    %c0_25 = arith.constant 0 : index
    %c1_26 = arith.constant 1 : index
    %c0_27 = arith.constant 0 : index
    %c0_28 = arith.constant 0 : index
    %19 = vector.load %arg3[%c0_25, %c1_26, %c0_27, %c0_28] : memref<1x16x8x8xf32, #tpu.memory_space<vmem>>, vector<1x1x8x8xf32>
    %20 = vector.shape_cast %19 : vector<1x1x8x8xf32> to vector<8x8xf32>
    %21 = vector.shape_cast %18 : vector<8x8xf32> to vector<1x1x8x8xf32>
    tpu.vector_store %arg3[%c0_25, %c1_26, %c0_27, %c0_28], %21 {strides = array<i32>} : memref<1x16x8x8xf32, #tpu.memory_space<vmem>>, vector<1x1x8x8xf32>,
    %c1_29 = arith.constant 1 : index
    %c0_30 = arith.constant 0 : index
    %22 = tpu.strided_load %arg5[%c1_29, %c0_30] {strides = array<i32: 2, 1>} : memref<16x8xf32, #tpu.memory_space<vmem>>, vector<8x8xf32>
    %c0_31 = arith.constant 0 : index
    %c3 = arith.constant 3 : index
    %c0_32 = arith.constant 0 : index
    %c0_33 = arith.constant 0 : index
    %23 = vector.load %arg3[%c0_31, %c3, %c0_32, %c0_33] : memref<1x16x8x8xf32, #tpu.memory_space<vmem>>, vector<1x1x8x8xf32>
    %24 = vector.shape_cast %23 : vector<1x1x8x8xf32> to vector<8x8xf32>
    %25 = vector.shape_cast %22 : vector<8x8xf32> to vector<1x1x8x8xf32>
    tpu.vector_store %arg3[%c0_31, %c3, %c0_32, %c0_33], %25 {strides = array<i32>} : memref<1x16x8x8xf32, #tpu.memory_space<vmem>>, vector<1x1x8x8xf32>,
    %c0_34 = arith.constant 0 : index
    %c1_35 = arith.constant 1 : index
    %c0_36 = arith.constant 0 : index
    %c0_37 = arith.constant 0 : index
    %26 = vector.load %arg2[%c0_34, %c1_35, %c0_36, %c0_37] : memref<1x4x16x16xf32, #tpu.memory_space<vmem>>, vector<1x1x16x16xf32>
    %27 = vector.shape_cast %26 : vector<1x1x16x16xf32> to vector<16x16xf32>
    %28 = tpu.transpose %27, [1, 0] : vector<16x16xf32> -> vector<16x16xf32>
    %c0_38 = arith.constant 0 : index
    %c0_39 = arith.constant 0 : index
    %29 = vector.load %arg4[%c0_38, %c0_39] : memref<16x16xf32, #tpu.memory_space<vmem>>, vector<16x16xf32>
    tpu.vector_store %arg4[%c0_38, %c0_39], %28 {strides = array<i32>} : memref<16x16xf32, #tpu.memory_space<vmem>>, vector<16x16xf32>,
    %c0_40 = arith.constant 0 : index
    %c0_41 = arith.constant 0 : index
    %30 = tpu.strided_load %arg4[%c0_40, %c0_41] {strides = array<i32: 2, 1>} : memref<16x16xf32, #tpu.memory_space<vmem>>, vector<8x16xf32>
    %31 = tpu.transpose %30, [1, 0] : vector<8x16xf32> -> vector<16x8xf32>
    %c0_42 = arith.constant 0 : index
    %c0_43 = arith.constant 0 : index
    %32 = vector.load %arg5[%c0_42, %c0_43] : memref<16x8xf32, #tpu.memory_space<vmem>>, vector<16x8xf32>
    tpu.vector_store %arg5[%c0_42, %c0_43], %31 {strides = array<i32>} : memref<16x8xf32, #tpu.memory_space<vmem>>, vector<16x8xf32>,
    %c0_44 = arith.constant 0 : index
    %c0_45 = arith.constant 0 : index
    %33 = tpu.strided_load %arg5[%c0_44, %c0_45] {strides = array<i32: 2, 1>} : memref<16x8xf32, #tpu.memory_space<vmem>>, vector<8x8xf32>
    %c0_46 = arith.constant 0 : index
    %c4 = arith.constant 4 : index
    %c0_47 = arith.constant 0 : index
    %c0_48 = arith.constant 0 : index
    %34 = vector.load %arg3[%c0_46, %c4, %c0_47, %c0_48] : memref<1x16x8x8xf32, #tpu.memory_space<vmem>>, vector<1x1x8x8xf32>
    %35 = vector.shape_cast %34 : vector<1x1x8x8xf32> to vector<8x8xf32>
    %36 = vector.shape_cast %33 : vector<8x8xf32> to vector<1x1x8x8xf32>
    tpu.vector_store %arg3[%c0_46, %c4, %c0_47, %c0_48], %36 {strides = array<i32>} : memref<1x16x8x8xf32, #tpu.memory_space<vmem>>, vector<1x1x8x8xf32>,
    %c1_49 = arith.constant 1 : index
    %c0_50 = arith.constant 0 : index
    %37 = tpu.strided_load %arg5[%c1_49, %c0_50] {strides = array<i32: 2, 1>} : memref<16x8xf32, #tpu.memory_space<vmem>>, vector<8x8xf32>
    %c0_51 = arith.constant 0 : index
    %c6 = arith.constant 6 : index
    %c0_52 = arith.constant 0 : index
    %c0_53 = arith.constant 0 : index
    %38 = vector.load %arg3[%c0_51, %c6, %c0_52, %c0_53] : memref<1x16x8x8xf32, #tpu.memory_space<vmem>>, vector<1x1x8x8xf32>
    %39 = vector.shape_cast %38 : vector<1x1x8x8xf32> to vector<8x8xf32>
    %40 = vector.shape_cast %37 : vector<8x8xf32> to vector<1x1x8x8xf32>
    tpu.vector_store %arg3[%c0_51, %c6, %c0_52, %c0_53], %40 {strides = array<i32>} : memref<1x16x8x8xf32, #tpu.memory_space<vmem>>, vector<1x1x8x8xf32>,
    %c1_54 = arith.constant 1 : index
    %c0_55 = arith.constant 0 : index
    %41 = tpu.strided_load %arg4[%c1_54, %c0_55] {strides = array<i32: 2, 1>} : memref<16x16xf32, #tpu.memory_space<vmem>>, vector<8x16xf32>
    %42 = tpu.transpose %41, [1, 0] : vector<8x16xf32> -> vector<16x8xf32>
    %c0_56 = arith.constant 0 : index
    %c0_57 = arith.constant 0 : index
    %43 = vector.load %arg5[%c0_56, %c0_57] : memref<16x8xf32, #tpu.memory_space<vmem>>, vector<16x8xf32>
    tpu.vector_store %arg5[%c0_56, %c0_57], %42 {strides = array<i32>} : memref<16x8xf32, #tpu.memory_space<vmem>>, vector<16x8xf32>,
    %c0_58 = arith.constant 0 : index
    %c0_59 = arith.constant 0 : index
    %44 = tpu.strided_load %arg5[%c0_58, %c0_59] {strides = array<i32: 2, 1>} : memref<16x8xf32, #tpu.memory_space<vmem>>, vector<8x8xf32>
    %c0_60 = arith.constant 0 : index
    %c5 = arith.constant 5 : index
    %c0_61 = arith.constant 0 : index
    %c0_62 = arith.constant 0 : index
    %45 = vector.load %arg3[%c0_60, %c5, %c0_61, %c0_62] : memref<1x16x8x8xf32, #tpu.memory_space<vmem>>, vector<1x1x8x8xf32>
    %46 = vector.shape_cast %45 : vector<1x1x8x8xf32> to vector<8x8xf32>
    %47 = vector.shape_cast %44 : vector<8x8xf32> to vector<1x1x8x8xf32>
    tpu.vector_store %arg3[%c0_60, %c5, %c0_61, %c0_62], %47 {strides = array<i32>} : memref<1x16x8x8xf32, #tpu.memory_space<vmem>>, vector<1x1x8x8xf32>,
    %c1_63 = arith.constant 1 : index
    %c0_64 = arith.constant 0 : index
    %48 = tpu.strided_load %arg5[%c1_63, %c0_64] {strides = array<i32: 2, 1>} : memref<16x8xf32, #tpu.memory_space<vmem>>, vector<8x8xf32>
    %c0_65 = arith.constant 0 : index
    %c7 = arith.constant 7 : index
    %c0_66 = arith.constant 0 : index
    %c0_67 = arith.constant 0 : index
    %49 = vector.load %arg3[%c0_65, %c7, %c0_66, %c0_67] : memref<1x16x8x8xf32, #tpu.memory_space<vmem>>, vector<1x1x8x8xf32>
    %50 = vector.shape_cast %49 : vector<1x1x8x8xf32> to vector<8x8xf32>
    %51 = vector.shape_cast %48 : vector<8x8xf32> to vector<1x1x8x8xf32>
    tpu.vector_store %arg3[%c0_65, %c7, %c0_66, %c0_67], %51 {strides = array<i32>} : memref<1x16x8x8xf32, #tpu.memory_space<vmem>>, vector<1x1x8x8xf32>,
    %c0_68 = arith.constant 0 : index
    %c2_69 = arith.constant 2 : index
    %c0_70 = arith.constant 0 : index
    %c0_71 = arith.constant 0 : index
    %52 = vector.load %arg2[%c0_68, %c2_69, %c0_70, %c0_71] : memref<1x4x16x16xf32, #tpu.memory_space<vmem>>, vector<1x1x16x16xf32>
    %53 = vector.shape_cast %52 : vector<1x1x16x16xf32> to vector<16x16xf32>
    %54 = tpu.transpose %53, [1, 0] : vector<16x16xf32> -> vector<16x16xf32>
    %c0_72 = arith.constant 0 : index
    %c0_73 = arith.constant 0 : index
    %55 = vector.load %arg4[%c0_72, %c0_73] : memref<16x16xf32, #tpu.memory_space<vmem>>, vector<16x16xf32>
    tpu.vector_store %arg4[%c0_72, %c0_73], %54 {strides = array<i32>} : memref<16x16xf32, #tpu.memory_space<vmem>>, vector<16x16xf32>,
    %c0_74 = arith.constant 0 : index
    %c0_75 = arith.constant 0 : index
    %56 = tpu.strided_load %arg4[%c0_74, %c0_75] {strides = array<i32: 2, 1>} : memref<16x16xf32, #tpu.memory_space<vmem>>, vector<8x16xf32>
    %57 = tpu.transpose %56, [1, 0] : vector<8x16xf32> -> vector<16x8xf32>
    %c0_76 = arith.constant 0 : index
    %c0_77 = arith.constant 0 : index
    %58 = vector.load %arg5[%c0_76, %c0_77] : memref<16x8xf32, #tpu.memory_space<vmem>>, vector<16x8xf32>
    tpu.vector_store %arg5[%c0_76, %c0_77], %57 {strides = array<i32>} : memref<16x8xf32, #tpu.memory_space<vmem>>, vector<16x8xf32>,
    %c0_78 = arith.constant 0 : index
    %c0_79 = arith.constant 0 : index
    %59 = tpu.strided_load %arg5[%c0_78, %c0_79] {strides = array<i32: 2, 1>} : memref<16x8xf32, #tpu.memory_space<vmem>>, vector<8x8xf32>
    %c0_80 = arith.constant 0 : index
    %c8 = arith.constant 8 : index
    %c0_81 = arith.constant 0 : index
    %c0_82 = arith.constant 0 : index
    %60 = vector.load %arg3[%c0_80, %c8, %c0_81, %c0_82] : memref<1x16x8x8xf32, #tpu.memory_space<vmem>>, vector<1x1x8x8xf32>
    %61 = vector.shape_cast %60 : vector<1x1x8x8xf32> to vector<8x8xf32>
    %62 = vector.shape_cast %59 : vector<8x8xf32> to vector<1x1x8x8xf32>
    tpu.vector_store %arg3[%c0_80, %c8, %c0_81, %c0_82], %62 {strides = array<i32>} : memref<1x16x8x8xf32, #tpu.memory_space<vmem>>, vector<1x1x8x8xf32>,
    %c1_83 = arith.constant 1 : index
    %c0_84 = arith.constant 0 : index
    %63 = tpu.strided_load %arg5[%c1_83, %c0_84] {strides = array<i32: 2, 1>} : memref<16x8xf32, #tpu.memory_space<vmem>>, vector<8x8xf32>
    %c0_85 = arith.constant 0 : index
    %c10 = arith.constant 10 : index
    %c0_86 = arith.constant 0 : index
    %c0_87 = arith.constant 0 : index
    %64 = vector.load %arg3[%c0_85, %c10, %c0_86, %c0_87] : memref<1x16x8x8xf32, #tpu.memory_space<vmem>>, vector<1x1x8x8xf32>
    %65 = vector.shape_cast %64 : vector<1x1x8x8xf32> to vector<8x8xf32>
    %66 = vector.shape_cast %63 : vector<8x8xf32> to vector<1x1x8x8xf32>
    tpu.vector_store %arg3[%c0_85, %c10, %c0_86, %c0_87], %66 {strides = array<i32>} : memref<1x16x8x8xf32, #tpu.memory_space<vmem>>, vector<1x1x8x8xf32>,
    %c1_88 = arith.constant 1 : index
    %c0_89 = arith.constant 0 : index
    %67 = tpu.strided_load %arg4[%c1_88, %c0_89] {strides = array<i32: 2, 1>} : memref<16x16xf32, #tpu.memory_space<vmem>>, vector<8x16xf32>
    %68 = tpu.transpose %67, [1, 0] : vector<8x16xf32> -> vector<16x8xf32>
    %c0_90 = arith.constant 0 : index
    %c0_91 = arith.constant 0 : index
    %69 = vector.load %arg5[%c0_90, %c0_91] : memref<16x8xf32, #tpu.memory_space<vmem>>, vector<16x8xf32>
    tpu.vector_store %arg5[%c0_90, %c0_91], %68 {strides = array<i32>} : memref<16x8xf32, #tpu.memory_space<vmem>>, vector<16x8xf32>,
    %c0_92 = arith.constant 0 : index
    %c0_93 = arith.constant 0 : index
    %70 = tpu.strided_load %arg5[%c0_92, %c0_93] {strides = array<i32: 2, 1>} : memref<16x8xf32, #tpu.memory_space<vmem>>, vector<8x8xf32>
    %c0_94 = arith.constant 0 : index
    %c9 = arith.constant 9 : index
    %c0_95 = arith.constant 0 : index
    %c0_96 = arith.constant 0 : index
    %71 = vector.load %arg3[%c0_94, %c9, %c0_95, %c0_96] : memref<1x16x8x8xf32, #tpu.memory_space<vmem>>, vector<1x1x8x8xf32>
    %72 = vector.shape_cast %71 : vector<1x1x8x8xf32> to vector<8x8xf32>
    %73 = vector.shape_cast %70 : vector<8x8xf32> to vector<1x1x8x8xf32>
    tpu.vector_store %arg3[%c0_94, %c9, %c0_95, %c0_96], %73 {strides = array<i32>} : memref<1x16x8x8xf32, #tpu.memory_space<vmem>>, vector<1x1x8x8xf32>,
    %c1_97 = arith.constant 1 : index
    %c0_98 = arith.constant 0 : index
    %74 = tpu.strided_load %arg5[%c1_97, %c0_98] {strides = array<i32: 2, 1>} : memref<16x8xf32, #tpu.memory_space<vmem>>, vector<8x8xf32>
    %c0_99 = arith.constant 0 : index
    %c11 = arith.constant 11 : index
    %c0_100 = arith.constant 0 : index
    %c0_101 = arith.constant 0 : index
    %75 = vector.load %arg3[%c0_99, %c11, %c0_100, %c0_101] : memref<1x16x8x8xf32, #tpu.memory_space<vmem>>, vector<1x1x8x8xf32>
    %76 = vector.shape_cast %75 : vector<1x1x8x8xf32> to vector<8x8xf32>
    %77 = vector.shape_cast %74 : vector<8x8xf32> to vector<1x1x8x8xf32>
    tpu.vector_store %arg3[%c0_99, %c11, %c0_100, %c0_101], %77 {strides = array<i32>} : memref<1x16x8x8xf32, #tpu.memory_space<vmem>>, vector<1x1x8x8xf32>,
    %c0_102 = arith.constant 0 : index
    %c3_103 = arith.constant 3 : index
    %c0_104 = arith.constant 0 : index
    %c0_105 = arith.constant 0 : index
    %78 = vector.load %arg2[%c0_102, %c3_103, %c0_104, %c0_105] : memref<1x4x16x16xf32, #tpu.memory_space<vmem>>, vector<1x1x16x16xf32>
    %79 = vector.shape_cast %78 : vector<1x1x16x16xf32> to vector<16x16xf32>
    %80 = tpu.transpose %79, [1, 0] : vector<16x16xf32> -> vector<16x16xf32>
    %c0_106 = arith.constant 0 : index
    %c0_107 = arith.constant 0 : index
    %81 = vector.load %arg4[%c0_106, %c0_107] : memref<16x16xf32, #tpu.memory_space<vmem>>, vector<16x16xf32>
    tpu.vector_store %arg4[%c0_106, %c0_107], %80 {strides = array<i32>} : memref<16x16xf32, #tpu.memory_space<vmem>>, vector<16x16xf32>,
    %c0_108 = arith.constant 0 : index
    %c0_109 = arith.constant 0 : index
    %82 = tpu.strided_load %arg4[%c0_108, %c0_109] {strides = array<i32: 2, 1>} : memref<16x16xf32, #tpu.memory_space<vmem>>, vector<8x16xf32>
    %83 = tpu.transpose %82, [1, 0] : vector<8x16xf32> -> vector<16x8xf32>
    %c0_110 = arith.constant 0 : index
    %c0_111 = arith.constant 0 : index
    %84 = vector.load %arg5[%c0_110, %c0_111] : memref<16x8xf32, #tpu.memory_space<vmem>>, vector<16x8xf32>
    tpu.vector_store %arg5[%c0_110, %c0_111], %83 {strides = array<i32>} : memref<16x8xf32, #tpu.memory_space<vmem>>, vector<16x8xf32>,
    %c0_112 = arith.constant 0 : index
    %c0_113 = arith.constant 0 : index
    %85 = tpu.strided_load %arg5[%c0_112, %c0_113] {strides = array<i32: 2, 1>} : memref<16x8xf32, #tpu.memory_space<vmem>>, vector<8x8xf32>
    %c0_114 = arith.constant 0 : index
    %c12 = arith.constant 12 : index
    %c0_115 = arith.constant 0 : index
    %c0_116 = arith.constant 0 : index
    %86 = vector.load %arg3[%c0_114, %c12, %c0_115, %c0_116] : memref<1x16x8x8xf32, #tpu.memory_space<vmem>>, vector<1x1x8x8xf32>
    %87 = vector.shape_cast %86 : vector<1x1x8x8xf32> to vector<8x8xf32>
    %88 = vector.shape_cast %85 : vector<8x8xf32> to vector<1x1x8x8xf32>
    tpu.vector_store %arg3[%c0_114, %c12, %c0_115, %c0_116], %88 {strides = array<i32>} : memref<1x16x8x8xf32, #tpu.memory_space<vmem>>, vector<1x1x8x8xf32>,
    %c1_117 = arith.constant 1 : index
    %c0_118 = arith.constant 0 : index
    %89 = tpu.strided_load %arg5[%c1_117, %c0_118] {strides = array<i32: 2, 1>} : memref<16x8xf32, #tpu.memory_space<vmem>>, vector<8x8xf32>
    %c0_119 = arith.constant 0 : index
    %c14 = arith.constant 14 : index
    %c0_120 = arith.constant 0 : index
    %c0_121 = arith.constant 0 : index
    %90 = vector.load %arg3[%c0_119, %c14, %c0_120, %c0_121] : memref<1x16x8x8xf32, #tpu.memory_space<vmem>>, vector<1x1x8x8xf32>
    %91 = vector.shape_cast %90 : vector<1x1x8x8xf32> to vector<8x8xf32>
    %92 = vector.shape_cast %89 : vector<8x8xf32> to vector<1x1x8x8xf32>
    tpu.vector_store %arg3[%c0_119, %c14, %c0_120, %c0_121], %92 {strides = array<i32>} : memref<1x16x8x8xf32, #tpu.memory_space<vmem>>, vector<1x1x8x8xf32>,
    %c1_122 = arith.constant 1 : index
    %c0_123 = arith.constant 0 : index
    %93 = tpu.strided_load %arg4[%c1_122, %c0_123] {strides = array<i32: 2, 1>} : memref<16x16xf32, #tpu.memory_space<vmem>>, vector<8x16xf32>
    %94 = tpu.transpose %93, [1, 0] : vector<8x16xf32> -> vector<16x8xf32>
    %c0_124 = arith.constant 0 : index
    %c0_125 = arith.constant 0 : index
    %95 = vector.load %arg5[%c0_124, %c0_125] : memref<16x8xf32, #tpu.memory_space<vmem>>, vector<16x8xf32>
    tpu.vector_store %arg5[%c0_124, %c0_125], %94 {strides = array<i32>} : memref<16x8xf32, #tpu.memory_space<vmem>>, vector<16x8xf32>,
    %c0_126 = arith.constant 0 : index
    %c0_127 = arith.constant 0 : index
    %96 = tpu.strided_load %arg5[%c0_126, %c0_127] {strides = array<i32: 2, 1>} : memref<16x8xf32, #tpu.memory_space<vmem>>, vector<8x8xf32>
    %c0_128 = arith.constant 0 : index
    %c13 = arith.constant 13 : index
    %c0_129 = arith.constant 0 : index
    %c0_130 = arith.constant 0 : index
    %97 = vector.load %arg3[%c0_128, %c13, %c0_129, %c0_130] : memref<1x16x8x8xf32, #tpu.memory_space<vmem>>, vector<1x1x8x8xf32>
    %98 = vector.shape_cast %97 : vector<1x1x8x8xf32> to vector<8x8xf32>
    %99 = vector.shape_cast %96 : vector<8x8xf32> to vector<1x1x8x8xf32>
    tpu.vector_store %arg3[%c0_128, %c13, %c0_129, %c0_130], %99 {strides = array<i32>} : memref<1x16x8x8xf32, #tpu.memory_space<vmem>>, vector<1x1x8x8xf32>,
    %c1_131 = arith.constant 1 : index
    %c0_132 = arith.constant 0 : index
    %100 = tpu.strided_load %arg5[%c1_131, %c0_132] {strides = array<i32: 2, 1>} : memref<16x8xf32, #tpu.memory_space<vmem>>, vector<8x8xf32>
    %c0_133 = arith.constant 0 : index
    %c15 = arith.constant 15 : index
    %c0_134 = arith.constant 0 : index
    %c0_135 = arith.constant 0 : index
    %101 = vector.load %arg3[%c0_133, %c15, %c0_134, %c0_135] : memref<1x16x8x8xf32, #tpu.memory_space<vmem>>, vector<1x1x8x8xf32>
    %102 = vector.shape_cast %101 : vector<1x1x8x8xf32> to vector<8x8xf32>
    %103 = vector.shape_cast %100 : vector<8x8xf32> to vector<1x1x8x8xf32>
    tpu.vector_store %arg3[%c0_133, %c15, %c0_134, %c0_135], %103 {strides = array<i32>} : memref<1x16x8x8xf32, #tpu.memory_space<vmem>>, vector<1x1x8x8xf32>,
    return
  }
  func.func @transform_0(%arg0: i32, %arg1: i32) -> (i32, i32, i32, i32) {
    %c0_i32 = arith.constant 0 : i32
    %c0_i32_0 = arith.constant 0 : i32
    %c0_i32_1 = arith.constant 0 : i32
    return %arg0, %arg1, %c0_i32, %c0_i32_0 : i32, i32, i32, i32
  }
  func.func @transform_1(%arg0: i32, %arg1: i32) -> (i32, i32, i32, i32) {
    %c0_i32 = arith.constant 0 : i32
    %c0_i32_0 = arith.constant 0 : i32
    %c0_i32_1 = arith.constant 0 : i32
    return %arg0, %arg1, %c0_i32, %c0_i32_0 : i32, i32, i32, i32
  }
}

</mosaic_0001>

<llo_original>
// kernel: tpu_custom_call.1
$region0: #{tpu_custom_call.1}
  #allocation0 [shape = 'u32[]', space=smem, size = 0x4, offset = 0x4, fixed_abs, tag = 'smem constant byte address 0x4 - core index']
  #allocation1 [shape = 'u32[144,128]{1,0:T(1,128)}', space=vmem, size = 0x12000, scoped, tag = 'internal scratch']
  #allocation2 [shape = 'f32[16,16]{1,0:T(8,128)}', space=vmem, size = 0x2000, scoped, tag = 'scratch operand']
  #allocation3 [shape = 'f32[16,8]{1,0:T(8,128)}', space=vmem, size = 0x2000, scoped, tag = 'scratch operand']
  %s0 = inlined_call_operand.hbm [shape: f32[2,4,16,16], index: 0, kind: input, shape index: {}]
  %s1 = inlined_call_operand.vmem [shape: f32[2,16,8,8], index: 1, kind: output, shape index: {}]
  %s2 = sld [smem:[#allocation0]]
  $region41: #{tpu_custom_call.1} parent=0
    _
  %s4 = ssub.s32 1, %s2
  %s5 = scalar_select 0, %s4, %s2
  $region1: #{tpu_custom_call.1} parent=0
    #allocation4 [shape = 'u8[65536]{0}', space=vmem, size = 0x10000, scoped, tag = 'input window, operand 0']
    #allocation5 [shape = 's32[2]{0}', space=sflag, size = 0x8, scoped, tag = 'scoped memory for tpu_custom_call.1']
    %6 = vsyncpa [#allocation5], 0
    %s7 = scalar_lea.sflag [#allocation5], 1
    %8 = vsyncpa %s7, 0
    loop: start=0, step=1, limit=4
    $region2: #{tpu_custom_call.1} parent=1 // loop_pre_header
      _
    $region3: #{tpu_custom_call.1} parent=1 // loop_header
      %s10 = sphi 0, %s14
      %p11 = scmp.ge.s32.totalorder %s10, 4
      %s17 = sphi 0, %s29
      %s18 = sphi 0, %s25
      %s19 = sphi 0, %s17
      %s20 = sphi 0, %s18
      %s21 = sphi 0, %s19
      %s22 = sphi 0, %s20
      %s34 = sphi 0, %s36
      %s37 = sphi 0, %s34
      %s38 = sphi 0, %s37
      %s54 = sphi 0, %s38
      %s62 = sphi 0, %s64
      %s65 = sphi 0, %s62
      %s66 = sphi 0, %s65
      %s82 = sphi 0, %s66
    $region4: #{tpu_custom_call.1} parent=1 // loop_header_branch
      %13 = sbr.rel (%p11) target = $region8
    $region5: #{tpu_custom_call.1} parent=1 // loop_body
      %s15 = ssub.s32 %s10, 1
      %s16 = ssub.s32 %s10, 2
      %s23 = sadd.s32 1, %s18
      %p24 = scmp.ge.s32.totalorder %s23, 1
      %s25 = scalar_select %p24, 0, %s23
      %s26 = sadd.s32 1, %s17
      %s27 = scalar_select %p24, %s26, %s17
      %p28 = scmp.ge.s32.totalorder %s27, 2
      %s29 = scalar_select %p28, 0, %s27
      %s30 = ssub.s32 %s17, %s29
      %s31 = ssub.s32 %s18, %s25
      %s32 = sor.u32 %s30, %s31
      %p33 = scmp.eq.s32.totalorder %s32, 0
      %s35 = sadd.s32 %s34, 1
      %s36 = scalar_select %p33, %s34, %s35
      %p39 = pneg %p33
      %p40 = scmp.eq.s32.totalorder %s10, 1
      %p41 = por %p39, %p40
      %p42 = scmp.ne.s32.totalorder %s34, %s37
      %p43 = scmp.eq.s32.totalorder %s10, 0
      %p44 = por %p42, %p43
      %p45 = scmp.ne.s32.totalorder %s34, %s37
      %p46 = scmp.eq.s32.totalorder %s15, 1
      %p47 = por %p45, %p46
      %p48 = scmp.ne.s32.totalorder %s37, %s38
      %p49 = scmp.eq.s32.totalorder %s15, 0
      %p50 = por %p48, %p49
      %p51 = scmp.ne.s32.totalorder %s37, %s38
      %p52 = scmp.eq.s32.totalorder %s16, 1
      %p53 = por %p51, %p52
      %p55 = scmp.ne.s32.totalorder %s38, %s54
      %p56 = scmp.eq.s32.totalorder %s16, 0
      %p57 = por %p55, %p56
      %s58 = ssub.s32 %s17, %s29
      %s59 = ssub.s32 %s18, %s25
      %s60 = sor.u32 %s58, %s59
      %p61 = scmp.eq.s32.totalorder %s60, 0
      %s63 = sadd.s32 %s62, 1
      %s64 = scalar_select %p61, %s62, %s63
      %p67 = pneg %p61
      %p68 = scmp.eq.s32.totalorder %s10, 1
      %p69 = por %p67, %p68
      %p70 = scmp.ne.s32.totalorder %s62, %s65
      %p71 = scmp.eq.s32.totalorder %s10, 0
      %p72 = por %p70, %p71
      %p73 = scmp.ne.s32.totalorder %s62, %s65
      %p74 = scmp.eq.s32.totalorder %s15, 1
      %p75 = por %p73, %p74
      %p76 = scmp.ne.s32.totalorder %s65, %s66
      %p77 = scmp.eq.s32.totalorder %s15, 0
      %p78 = por %p76, %p77
      %p79 = scmp.ne.s32.totalorder %s65, %s66
      %p80 = scmp.eq.s32.totalorder %s16, 1
      %p81 = por %p79, %p80
      %p83 = scmp.ne.s32.totalorder %s66, %s82
      %p84 = scmp.eq.s32.totalorder %s16, 0
      %p85 = por %p83, %p84
      %p86 = scmp.le.s32.totalorder 1, %s10
      %p87 = scmp.lt.s32.totalorder %s10, 3
      %p88 = pnand %p86, %p87
      %p89 = pneg %p88
      // Predicated region
      $region9: #{tpu_custom_call.1} parent=5 // pred_check
        _
      $region10: #{tpu_custom_call.1} parent=5 // pred_check_branch
        %91 = sbr.rel (%p88) target = $region12
      $region11: #{tpu_custom_call.1} parent=5 // pred_region
        %s92 = ssub.s32 %s10, 1
      $region12: #{tpu_custom_call.1} parent=5 // pred_fallthru
        _
      %p93 = scmp.lt.s32.totalorder %s10, 2
      // Predicated region
      $region13: #{tpu_custom_call.1} parent=5 // pred_check
        %p94 = pneg %p93
      $region14: #{tpu_custom_call.1} parent=5 // pred_check_branch
        %96 = sbr.rel (%p94) target = $region16
      $region15: #{tpu_custom_call.1} parent=5 // pred_region
        // Predicated region
        $region17: #{tpu_custom_call.1} parent=15 // pred_check
          %p97 = pneg %p44
        $region18: #{tpu_custom_call.1} parent=15 // pred_check_branch
          %99 = sbr.rel (%p97) target = $region20
        $region19: #{tpu_custom_call.1} parent=15 // pred_region
          %s100 = sand.u32 %s34, 1
          %s101 = scalar_lea.sflag [#allocation5], %s100
          %s102 = sand.u32 %s34, 1
          %s103 = smul.addr %s102, 64
          %s104 = scalar_lea.vmem [#allocation4], %s103
          %s105 = smul.u32 4, %s18
          %s107 = ssub.s32 1024, 1024
          %108 = vsyncadd %s101, %s107
          %s109 = smul.addr %s105, 2
          %s110 = smul.addr %s17, 8
          %s111 = sadd.s32 %s109, %s110
          %s112 = smul.addr %s111, 128
          %s113 = scalar_lea.hbm %s0, %s112
          %s114 = sshll.u32 %s104, 4
          %s115 = int_to_ptr.vmem [resolvable:$true] %s114
          %120 = dma.hbm_to_vmem [thread:$0]  %s113, 1024, %s115, %s101, 128, 128, 8
        $region20: #{tpu_custom_call.1} parent=15 // pred_fallthru
          _
      $region16: #{tpu_custom_call.1} parent=5 // pred_fallthru
        _
      %p121 = scmp.le.s32.totalorder 1, %s10
      %p122 = scmp.lt.s32.totalorder %s10, 3
      %p123 = pnand %p121, %p122
      %p124 = pneg %p123
      // Predicated region
      $region21: #{tpu_custom_call.1} parent=5 // pred_check
        _
      $region22: #{tpu_custom_call.1} parent=5 // pred_check_branch
        %126 = sbr.rel (%p123) target = $region24
      $region23: #{tpu_custom_call.1} parent=5 // pred_region
        %s127 = ssub.s32 %s10, 1
        %s128 = sand.u32 %s37, 1
        %s129 = scalar_lea.sflag [#allocation5], %s128
        %s130 = sand.u32 %s37, 1
        %s131 = smul.addr %s130, 64
        %s132 = scalar_lea.vmem [#allocation4], %s131
        // Predicated region
        $region25: #{tpu_custom_call.1} parent=23 // pred_check
          %p133 = pneg %p50
        $region26: #{tpu_custom_call.1} parent=23 // pred_check_branch
          %135 = sbr.rel (%p133) target = $region28
        $region27: #{tpu_custom_call.1} parent=23 // pred_region
          %136 = dma.done %s129, 1024
        $region28: #{tpu_custom_call.1} parent=23 // pred_fallthru
          _
        %s137 = sand.u32 %s37, 1
        %s138 = scalar_lea.sflag [#allocation5], %s137
        %s139 = sand.u32 %s37, 1
        %s140 = smul.addr %s139, 64
        %s141 = scalar_lea.vmem [#allocation4], %s140
        %p142 = pneg %p50
        %p143 = pneg %p47
        %p144 = pneg %p78
        %p145 = pneg %p75
        %s146 = smul.u32 16, %s20
        %p147 = scmp.lt.s32.totalorder %s19, 1
        %s148 = scalar_select %p147, %s19, 1
        %p149 = scmp.lt.s32.totalorder %s146, 15
        %s150 = scalar_select %p149, %s146, 15
        %s151 = smul.addr %s148, 16
        %s152 = sadd.s32 %s150, %s151
        %s153 = smul.addr %s152, 8
        %s154 = scalar_lea.vmem %s1, %s153
        %s155 = smul.u32 4, %s20
        %s156 = smul.u32 16, %s20
        %p157 = scmp.lt.s32.totalorder %s19, 1
        %s158 = scalar_select %p157, %s19, 1
        %p159 = scmp.lt.s32.totalorder %s156, 15
        %s160 = scalar_select %p159, %s156, 15
        %s161 = smul.addr %s158, 16
        %s162 = sadd.s32 %s160, %s161
        %s163 = smul.addr %s162, 8
        %s164 = scalar_lea.vmem %s1, %s163
        %s165 = smul.u32 16, %s20
        %v166 = vld [vmem:[%s132] sm:$0xff]
        %v167 = vld [vmem:[%s132 + $0x8] sm:$0xff]
        %168 = vxpose.xlu0.b32.start [1/16] %v166, 128
        %169 = vxpose.xlu0.b32.cont [2/16] %v167, 128
        %170 = vxpose.xlu0.b32.cont [3/16] 0.0, 128
        %171 = vxpose.xlu0.b32.cont [4/16] 0.0, 128
        %172 = vxpose.xlu0.b32.cont [5/16] 0.0, 128
        %173 = vxpose.xlu0.b32.cont [6/16] 0.0, 128
        %174 = vxpose.xlu0.b32.cont [7/16] 0.0, 128
        %175 = vxpose.xlu0.b32.cont [8/16] 0.0, 128
        %176 = vxpose.xlu0.b32.cont [9/16] 0.0, 128
        %177 = vxpose.xlu0.b32.cont [10/16] 0.0, 128
        %178 = vxpose.xlu0.b32.cont [11/16] 0.0, 128
        %179 = vxpose.xlu0.b32.cont [12/16] 0.0, 128
        %180 = vxpose.xlu0.b32.cont [13/16] 0.0, 128
        %181 = vxpose.xlu0.b32.cont [14/16] 0.0, 128
        %182 = vxpose.xlu0.b32.cont [15/16] 0.0, 128
        %183 = vxpose.xlu0.b32.end [16/16] 0.0, 128
        %v184 = vpop.trf.xlu0
        %v185 = vpop.trf.xlu0
        %v186 = vpop.trf.xlu0
        %v187 = vpop.trf.xlu0
        %v188 = vpop.trf.xlu0
        %v189 = vpop.trf.xlu0
        %v190 = vpop.trf.xlu0
        %v191 = vpop.trf.xlu0
        %v192 = vpop.trf.xlu0
        %v193 = vpop.trf.xlu0
        %v194 = vpop.trf.xlu0
        %v195 = vpop.trf.xlu0
        %v196 = vpop.trf.xlu0
        %v197 = vpop.trf.xlu0
        %v198 = vpop.trf.xlu0
        %v199 = vpop.trf.xlu0
        %vm200 = vcmask 130048
        %201 = vst.msk [vmem:[#allocation2] sm:$0xff] %vm200, %v184
        %202 = vst.msk [vmem:[#allocation2 + $0x8] sm:$0xff] %vm200, %v185
        %v203 = vld [vmem:[#allocation2] ss:$2 sm:$0xff]
        %204 = vxpose.xlu0.b32.start [1/16] %v203, 128
        %205 = vxpose.xlu0.b32.cont [2/16] 0.0, 128
        %206 = vxpose.xlu0.b32.cont [3/16] 0.0, 128
        %207 = vxpose.xlu0.b32.cont [4/16] 0.0, 128
        %208 = vxpose.xlu0.b32.cont [5/16] 0.0, 128
        %209 = vxpose.xlu0.b32.cont [6/16] 0.0, 128
        %210 = vxpose.xlu0.b32.cont [7/16] 0.0, 128
        %211 = vxpose.xlu0.b32.cont [8/16] 0.0, 128
        %212 = vxpose.xlu0.b32.cont [9/16] 0.0, 128
        %213 = vxpose.xlu0.b32.cont [10/16] 0.0, 128
        %214 = vxpose.xlu0.b32.cont [11/16] 0.0, 128
        %215 = vxpose.xlu0.b32.cont [12/16] 0.0, 128
        %216 = vxpose.xlu0.b32.cont [13/16] 0.0, 128
        %217 = vxpose.xlu0.b32.cont [14/16] 0.0, 128
        %218 = vxpose.xlu0.b32.cont [15/16] 0.0, 128
        %219 = vxpose.xlu0.b32.end [16/16] 0.0, 128
        %v220 = vpop.trf.xlu0
        %v221 = vpop.trf.xlu0
        %v222 = vpop.trf.xlu0
        %v223 = vpop.trf.xlu0
        %v224 = vpop.trf.xlu0
        %v225 = vpop.trf.xlu0
        %v226 = vpop.trf.xlu0
        %v227 = vpop.trf.xlu0
        %v228 = vpop.trf.xlu0
        %v229 = vpop.trf.xlu0
        %v230 = vpop.trf.xlu0
        %v231 = vpop.trf.xlu0
        %v232 = vpop.trf.xlu0
        %v233 = vpop.trf.xlu0
        %v234 = vpop.trf.xlu0
        %v235 = vpop.trf.xlu0
        %vm236 = vcmask 64512
        %237 = vst.msk [vmem:[#allocation3] sm:$0xff] %vm236, %v220
        %238 = vst.msk [vmem:[#allocation3 + $0x8] sm:$0xff] %vm236, %v221
        %v239 = vld [vmem:[#allocation3] ss:$2 sm:$0xff]
        %240 = vst.msk [vmem:[%s164] sm:$0xff] %vm236, %v239
        %s241 = scalar_lea.vmem [#allocation3], 1
        %v242 = vld [vmem:[%s241] ss:$2 sm:$0xff]
        %s243 = scalar_lea.vmem %s164, 16
        %244 = vst.msk [vmem:[%s243] sm:$0xff] %vm236, %v242
        %s245 = scalar_lea.vmem [#allocation2], 1
        %v246 = vld [vmem:[%s245] ss:$2 sm:$0xff]
        %247 = vxpose.xlu0.b32.start [1/16] %v246, 128
        %248 = vxpose.xlu0.b32.cont [2/16] 0.0, 128
        %249 = vxpose.xlu0.b32.cont [3/16] 0.0, 128
        %250 = vxpose.xlu0.b32.cont [4/16] 0.0, 128
        %251 = vxpose.xlu0.b32.cont [5/16] 0.0, 128
        %252 = vxpose.xlu0.b32.cont [6/16] 0.0, 128
        %253 = vxpose.xlu0.b32.cont [7/16] 0.0, 128
        %254 = vxpose.xlu0.b32.cont [8/16] 0.0, 128
        %255 = vxpose.xlu0.b32.cont [9/16] 0.0, 128
        %256 = vxpose.xlu0.b32.cont [10/16] 0.0, 128
        %257 = vxpose.xlu0.b32.cont [11/16] 0.0, 128
        %258 = vxpose.xlu0.b32.cont [12/16] 0.0, 128
        %259 = vxpose.xlu0.b32.cont [13/16] 0.0, 128
        %260 = vxpose.xlu0.b32.cont [14/16] 0.0, 128
        %261 = vxpose.xlu0.b32.cont [15/16] 0.0, 128
        %262 = vxpose.xlu0.b32.end [16/16] 0.0, 128
        %v263 = vpop.trf.xlu0
        %v264 = vpop.trf.xlu0
        %v265 = vpop.trf.xlu0
        %v266 = vpop.trf.xlu0
        %v267 = vpop.trf.xlu0
        %v268 = vpop.trf.xlu0
        %v269 = vpop.trf.xlu0
        %v270 = vpop.trf.xlu0
        %v271 = vpop.trf.xlu0
        %v272 = vpop.trf.xlu0
        %v273 = vpop.trf.xlu0
        %v274 = vpop.trf.xlu0
        %v275 = vpop.trf.xlu0
        %v276 = vpop.trf.xlu0
        %v277 = vpop.trf.xlu0
        %v278 = vpop.trf.xlu0
        %279 = vst.msk [vmem:[#allocation3] sm:$0xff] %vm236, %v263
        %280 = vst.msk [vmem:[#allocation3 + $0x8] sm:$0xff] %vm236, %v264
        %v281 = vld [vmem:[#allocation3] ss:$2 sm:$0xff]
        %s282 = scalar_lea.vmem %s164, 8
        %283 = vst.msk [vmem:[%s282] sm:$0xff] %vm236, %v281
        %v284 = vld [vmem:[%s241] ss:$2 sm:$0xff]
        %s285 = scalar_lea.vmem %s164, 24
        %286 = vst.msk [vmem:[%s285] sm:$0xff] %vm236, %v284
        %s287 = scalar_lea.vmem %s132, 16 [#allocation4]
        %v288 = vld [vmem:[%s287] sm:$0xff]
        %v289 = vld [vmem:[%s287 + $0x8] sm:$0xff]
        %290 = vxpose.xlu0.b32.start [1/16] %v288, 128
        %291 = vxpose.xlu0.b32.cont [2/16] %v289, 128
        %292 = vxpose.xlu0.b32.cont [3/16] 0.0, 128
        %293 = vxpose.xlu0.b32.cont [4/16] 0.0, 128
        %294 = vxpose.xlu0.b32.cont [5/16] 0.0, 128
        %295 = vxpose.xlu0.b32.cont [6/16] 0.0, 128
        %296 = vxpose.xlu0.b32.cont [7/16] 0.0, 128
        %297 = vxpose.xlu0.b32.cont [8/16] 0.0, 128
        %298 = vxpose.xlu0.b32.cont [9/16] 0.0, 128
        %299 = vxpose.xlu0.b32.cont [10/16] 0.0, 128
        %300 = vxpose.xlu0.b32.cont [11/16] 0.0, 128
        %301 = vxpose.xlu0.b32.cont [12/16] 0.0, 128
        %302 = vxpose.xlu0.b32.cont [13/16] 0.0, 128
        %303 = vxpose.xlu0.b32.cont [14/16] 0.0, 128
        %304 = vxpose.xlu0.b32.cont [15/16] 0.0, 128
        %305 = vxpose.xlu0.b32.end [16/16] 0.0, 128
        %v306 = vpop.trf.xlu0
        %v307 = vpop.trf.xlu0
        %v308 = vpop.trf.xlu0
        %v309 = vpop.trf.xlu0
        %v310 = vpop.trf.xlu0
        %v311 = vpop.trf.xlu0
        %v312 = vpop.trf.xlu0
        %v313 = vpop.trf.xlu0
        %v314 = vpop.trf.xlu0
        %v315 = vpop.trf.xlu0
        %v316 = vpop.trf.xlu0
        %v317 = vpop.trf.xlu0
        %v318 = vpop.trf.xlu0
        %v319 = vpop.trf.xlu0
        %v320 = vpop.trf.xlu0
        %v321 = vpop.trf.xlu0
        %322 = vst.msk [vmem:[#allocation2] sm:$0xff] %vm200, %v306
        %323 = vst.msk [vmem:[#allocation2 + $0x8] sm:$0xff] %vm200, %v307
        %v324 = vld [vmem:[#allocation2] ss:$2 sm:$0xff]
        %325 = vxpose.xlu0.b32.start [1/16] %v324, 128
        %326 = vxpose.xlu0.b32.cont [2/16] 0.0, 128
        %327 = vxpose.xlu0.b32.cont [3/16] 0.0, 128
        %328 = vxpose.xlu0.b32.cont [4/16] 0.0, 128
        %329 = vxpose.xlu0.b32.cont [5/16] 0.0, 128
        %330 = vxpose.xlu0.b32.cont [6/16] 0.0, 128
        %331 = vxpose.xlu0.b32.cont [7/16] 0.0, 128
        %332 = vxpose.xlu0.b32.cont [8/16] 0.0, 128
        %333 = vxpose.xlu0.b32.cont [9/16] 0.0, 128
        %334 = vxpose.xlu0.b32.cont [10/16] 0.0, 128
        %335 = vxpose.xlu0.b32.cont [11/16] 0.0, 128
        %336 = vxpose.xlu0.b32.cont [12/16] 0.0, 128
        %337 = vxpose.xlu0.b32.cont [13/16] 0.0, 128
        %338 = vxpose.xlu0.b32.cont [14/16] 0.0, 128
        %339 = vxpose.xlu0.b32.cont [15/16] 0.0, 128
        %340 = vxpose.xlu0.b32.end [16/16] 0.0, 128
        %v341 = vpop.trf.xlu0
        %v342 = vpop.trf.xlu0
        %v343 = vpop.trf.xlu0
        %v344 = vpop.trf.xlu0
        %v345 = vpop.trf.xlu0
        %v346 = vpop.trf.xlu0
        %v347 = vpop.trf.xlu0
        %v348 = vpop.trf.xlu0
        %v349 = vpop.trf.xlu0
        %v350 = vpop.trf.xlu0
        %v351 = vpop.trf.xlu0
        %v352 = vpop.trf.xlu0
        %v353 = vpop.trf.xlu0
        %v354 = vpop.trf.xlu0
        %v355 = vpop.trf.xlu0
        %v356 = vpop.trf.xlu0
        %357 = vst.msk [vmem:[#allocation3] sm:$0xff] %vm236, %v341
        %358 = vst.msk [vmem:[#allocation3 + $0x8] sm:$0xff] %vm236, %v342
        %v359 = vld [vmem:[#allocation3] ss:$2 sm:$0xff]
        %s360 = scalar_lea.vmem %s164, 32
        %361 = vst.msk [vmem:[%s360] sm:$0xff] %vm236, %v359
        %v362 = vld [vmem:[%s241] ss:$2 sm:$0xff]
        %s363 = scalar_lea.vmem %s164, 48
        %364 = vst.msk [vmem:[%s363] sm:$0xff] %vm236, %v362
        %v365 = vld [vmem:[%s245] ss:$2 sm:$0xff]
        %366 = vxpose.xlu0.b32.start [1/16] %v365, 128
        %367 = vxpose.xlu0.b32.cont [2/16] 0.0, 128
        %368 = vxpose.xlu0.b32.cont [3/16] 0.0, 128
        %369 = vxpose.xlu0.b32.cont [4/16] 0.0, 128
        %370 = vxpose.xlu0.b32.cont [5/16] 0.0, 128
        %371 = vxpose.xlu0.b32.cont [6/16] 0.0, 128
        %372 = vxpose.xlu0.b32.cont [7/16] 0.0, 128
        %373 = vxpose.xlu0.b32.cont [8/16] 0.0, 128
        %374 = vxpose.xlu0.b32.cont [9/16] 0.0, 128
        %375 = vxpose.xlu0.b32.cont [10/16] 0.0, 128
        %376 = vxpose.xlu0.b32.cont [11/16] 0.0, 128
        %377 = vxpose.xlu0.b32.cont [12/16] 0.0, 128
        %378 = vxpose.xlu0.b32.cont [13/16] 0.0, 128
        %379 = vxpose.xlu0.b32.cont [14/16] 0.0, 128
        %380 = vxpose.xlu0.b32.cont [15/16] 0.0, 128
        %381 = vxpose.xlu0.b32.end [16/16] 0.0, 128
        %v382 = vpop.trf.xlu0
        %v383 = vpop.trf.xlu0
        %v384 = vpop.trf.xlu0
        %v385 = vpop.trf.xlu0
        %v386 = vpop.trf.xlu0
        %v387 = vpop.trf.xlu0
        %v388 = vpop.trf.xlu0
        %v389 = vpop.trf.xlu0
        %v390 = vpop.trf.xlu0
        %v391 = vpop.trf.xlu0
        %v392 = vpop.trf.xlu0
        %v393 = vpop.trf.xlu0
        %v394 = vpop.trf.xlu0
        %v395 = vpop.trf.xlu0
        %v396 = vpop.trf.xlu0
        %v397 = vpop.trf.xlu0
        %398 = vst.msk [vmem:[#allocation3] sm:$0xff] %vm236, %v382
        %399 = vst.msk [vmem:[#allocation3 + $0x8] sm:$0xff] %vm236, %v383
        %v400 = vld [vmem:[#allocation3] ss:$2 sm:$0xff]
        %s401 = scalar_lea.vmem %s164, 40
        %402 = vst.msk [vmem:[%s401] sm:$0xff] %vm236, %v400
        %v403 = vld [vmem:[%s241] ss:$2 sm:$0xff]
        %s404 = scalar_lea.vmem %s164, 56
        %405 = vst.msk [vmem:[%s404] sm:$0xff] %vm236, %v403
        %s406 = scalar_lea.vmem %s132, 32 [#allocation4]
        %v407 = vld [vmem:[%s406] sm:$0xff]
        %v408 = vld [vmem:[%s406 + $0x8] sm:$0xff]
        %409 = vxpose.xlu0.b32.start [1/16] %v407, 128
        %410 = vxpose.xlu0.b32.cont [2/16] %v408, 128
        %411 = vxpose.xlu0.b32.cont [3/16] 0.0, 128
        %412 = vxpose.xlu0.b32.cont [4/16] 0.0, 128
        %413 = vxpose.xlu0.b32.cont [5/16] 0.0, 128
        %414 = vxpose.xlu0.b32.cont [6/16] 0.0, 128
        %415 = vxpose.xlu0.b32.cont [7/16] 0.0, 128
        %416 = vxpose.xlu0.b32.cont [8/16] 0.0, 128
        %417 = vxpose.xlu0.b32.cont [9/16] 0.0, 128
        %418 = vxpose.xlu0.b32.cont [10/16] 0.0, 128
        %419 = vxpose.xlu0.b32.cont [11/16] 0.0, 128
        %420 = vxpose.xlu0.b32.cont [12/16] 0.0, 128
        %421 = vxpose.xlu0.b32.cont [13/16] 0.0, 128
        %422 = vxpose.xlu0.b32.cont [14/16] 0.0, 128
        %423 = vxpose.xlu0.b32.cont [15/16] 0.0, 128
        %424 = vxpose.xlu0.b32.end [16/16] 0.0, 128
        %v425 = vpop.trf.xlu0
        %v426 = vpop.trf.xlu0
        %v427 = vpop.trf.xlu0
        %v428 = vpop.trf.xlu0
        %v429 = vpop.trf.xlu0
        %v430 = vpop.trf.xlu0
        %v431 = vpop.trf.xlu0
        %v432 = vpop.trf.xlu0
        %v433 = vpop.trf.xlu0
        %v434 = vpop.trf.xlu0
        %v435 = vpop.trf.xlu0
        %v436 = vpop.trf.xlu0
        %v437 = vpop.trf.xlu0
        %v438 = vpop.trf.xlu0
        %v439 = vpop.trf.xlu0
        %v440 = vpop.trf.xlu0
        %441 = vst.msk [vmem:[#allocation2] sm:$0xff] %vm200, %v425
        %442 = vst.msk [vmem:[#allocation2 + $0x8] sm:$0xff] %vm200, %v426
        %v443 = vld [vmem:[#allocation2] ss:$2 sm:$0xff]
        %444 = vxpose.xlu0.b32.start [1/16] %v443, 128
        %445 = vxpose.xlu0.b32.cont [2/16] 0.0, 128
        %446 = vxpose.xlu0.b32.cont [3/16] 0.0, 128
        %447 = vxpose.xlu0.b32.cont [4/16] 0.0, 128
        %448 = vxpose.xlu0.b32.cont [5/16] 0.0, 128
        %449 = vxpose.xlu0.b32.cont [6/16] 0.0, 128
        %450 = vxpose.xlu0.b32.cont [7/16] 0.0, 128
        %451 = vxpose.xlu0.b32.cont [8/16] 0.0, 128
        %452 = vxpose.xlu0.b32.cont [9/16] 0.0, 128
        %453 = vxpose.xlu0.b32.cont [10/16] 0.0, 128
        %454 = vxpose.xlu0.b32.cont [11/16] 0.0, 128
        %455 = vxpose.xlu0.b32.cont [12/16] 0.0, 128
        %456 = vxpose.xlu0.b32.cont [13/16] 0.0, 128
        %457 = vxpose.xlu0.b32.cont [14/16] 0.0, 128
        %458 = vxpose.xlu0.b32.cont [15/16] 0.0, 128
        %459 = vxpose.xlu0.b32.end [16/16] 0.0, 128
        %v460 = vpop.trf.xlu0
        %v461 = vpop.trf.xlu0
        %v462 = vpop.trf.xlu0
        %v463 = vpop.trf.xlu0
        %v464 = vpop.trf.xlu0
        %v465 = vpop.trf.xlu0
        %v466 = vpop.trf.xlu0
        %v467 = vpop.trf.xlu0
        %v468 = vpop.trf.xlu0
        %v469 = vpop.trf.xlu0
        %v470 = vpop.trf.xlu0
        %v471 = vpop.trf.xlu0
        %v472 = vpop.trf.xlu0
        %v473 = vpop.trf.xlu0
        %v474 = vpop.trf.xlu0
        %v475 = vpop.trf.xlu0
        %476 = vst.msk [vmem:[#allocation3] sm:$0xff] %vm236, %v460
        %477 = vst.msk [vmem:[#allocation3 + $0x8] sm:$0xff] %vm236, %v461
        %v478 = vld [vmem:[#allocation3] ss:$2 sm:$0xff]
        %s479 = scalar_lea.vmem %s164, 64
        %480 = vst.msk [vmem:[%s479] sm:$0xff] %vm236, %v478
        %v481 = vld [vmem:[%s241] ss:$2 sm:$0xff]
        %s482 = scalar_lea.vmem %s164, 80
        %483 = vst.msk [vmem:[%s482] sm:$0xff] %vm236, %v481
        %v484 = vld [vmem:[%s245] ss:$2 sm:$0xff]
        %485 = vxpose.xlu0.b32.start [1/16] %v484, 128
        %486 = vxpose.xlu0.b32.cont [2/16] 0.0, 128
        %487 = vxpose.xlu0.b32.cont [3/16] 0.0, 128
        %488 = vxpose.xlu0.b32.cont [4/16] 0.0, 128
        %489 = vxpose.xlu0.b32.cont [5/16] 0.0, 128
        %490 = vxpose.xlu0.b32.cont [6/16] 0.0, 128
        %491 = vxpose.xlu0.b32.cont [7/16] 0.0, 128
        %492 = vxpose.xlu0.b32.cont [8/16] 0.0, 128
        %493 = vxpose.xlu0.b32.cont [9/16] 0.0, 128
        %494 = vxpose.xlu0.b32.cont [10/16] 0.0, 128
        %495 = vxpose.xlu0.b32.cont [11/16] 0.0, 128
        %496 = vxpose.xlu0.b32.cont [12/16] 0.0, 128
        %497 = vxpose.xlu0.b32.cont [13/16] 0.0, 128
        %498 = vxpose.xlu0.b32.cont [14/16] 0.0, 128
        %499 = vxpose.xlu0.b32.cont [15/16] 0.0, 128
        %500 = vxpose.xlu0.b32.end [16/16] 0.0, 128
        %v501 = vpop.trf.xlu0
        %v502 = vpop.trf.xlu0
        %v503 = vpop.trf.xlu0
        %v504 = vpop.trf.xlu0
        %v505 = vpop.trf.xlu0
        %v506 = vpop.trf.xlu0
        %v507 = vpop.trf.xlu0
        %v508 = vpop.trf.xlu0
        %v509 = vpop.trf.xlu0
        %v510 = vpop.trf.xlu0
        %v511 = vpop.trf.xlu0
        %v512 = vpop.trf.xlu0
        %v513 = vpop.trf.xlu0
        %v514 = vpop.trf.xlu0
        %v515 = vpop.trf.xlu0
        %v516 = vpop.trf.xlu0
        %517 = vst.msk [vmem:[#allocation3] sm:$0xff] %vm236, %v501
        %518 = vst.msk [vmem:[#allocation3 + $0x8] sm:$0xff] %vm236, %v502
        %v519 = vld [vmem:[#allocation3] ss:$2 sm:$0xff]
        %s520 = scalar_lea.vmem %s164, 72
        %521 = vst.msk [vmem:[%s520] sm:$0xff] %vm236, %v519
        %v522 = vld [vmem:[%s241] ss:$2 sm:$0xff]
        %s523 = scalar_lea.vmem %s164, 88
        %524 = vst.msk [vmem:[%s523] sm:$0xff] %vm236, %v522
        %s525 = scalar_lea.vmem %s132, 48 [#allocation4]
        %v526 = vld [vmem:[%s525] sm:$0xff]
        %v527 = vld [vmem:[%s525 + $0x8] sm:$0xff]
        %528 = vxpose.xlu0.b32.start [1/16] %v526, 128
        %529 = vxpose.xlu0.b32.cont [2/16] %v527, 128
        %530 = vxpose.xlu0.b32.cont [3/16] 0.0, 128
        %531 = vxpose.xlu0.b32.cont [4/16] 0.0, 128
        %532 = vxpose.xlu0.b32.cont [5/16] 0.0, 128
        %533 = vxpose.xlu0.b32.cont [6/16] 0.0, 128
        %534 = vxpose.xlu0.b32.cont [7/16] 0.0, 128
        %535 = vxpose.xlu0.b32.cont [8/16] 0.0, 128
        %536 = vxpose.xlu0.b32.cont [9/16] 0.0, 128
        %537 = vxpose.xlu0.b32.cont [10/16] 0.0, 128
        %538 = vxpose.xlu0.b32.cont [11/16] 0.0, 128
        %539 = vxpose.xlu0.b32.cont [12/16] 0.0, 128
        %540 = vxpose.xlu0.b32.cont [13/16] 0.0, 128
        %541 = vxpose.xlu0.b32.cont [14/16] 0.0, 128
        %542 = vxpose.xlu0.b32.cont [15/16] 0.0, 128
        %543 = vxpose.xlu0.b32.end [16/16] 0.0, 128
        %v544 = vpop.trf.xlu0
        %v545 = vpop.trf.xlu0
        %v546 = vpop.trf.xlu0
        %v547 = vpop.trf.xlu0
        %v548 = vpop.trf.xlu0
        %v549 = vpop.trf.xlu0
        %v550 = vpop.trf.xlu0
        %v551 = vpop.trf.xlu0
        %v552 = vpop.trf.xlu0
        %v553 = vpop.trf.xlu0
        %v554 = vpop.trf.xlu0
        %v555 = vpop.trf.xlu0
        %v556 = vpop.trf.xlu0
        %v557 = vpop.trf.xlu0
        %v558 = vpop.trf.xlu0
        %v559 = vpop.trf.xlu0
        %560 = vst.msk [vmem:[#allocation2] sm:$0xff] %vm200, %v544
        %561 = vst.msk [vmem:[#allocation2 + $0x8] sm:$0xff] %vm200, %v545
        %v562 = vld [vmem:[#allocation2] ss:$2 sm:$0xff]
        %563 = vxpose.xlu0.b32.start [1/16] %v562, 128
        %564 = vxpose.xlu0.b32.cont [2/16] 0.0, 128
        %565 = vxpose.xlu0.b32.cont [3/16] 0.0, 128
        %566 = vxpose.xlu0.b32.cont [4/16] 0.0, 128
        %567 = vxpose.xlu0.b32.cont [5/16] 0.0, 128
        %568 = vxpose.xlu0.b32.cont [6/16] 0.0, 128
        %569 = vxpose.xlu0.b32.cont [7/16] 0.0, 128
        %570 = vxpose.xlu0.b32.cont [8/16] 0.0, 128
        %571 = vxpose.xlu0.b32.cont [9/16] 0.0, 128
        %572 = vxpose.xlu0.b32.cont [10/16] 0.0, 128
        %573 = vxpose.xlu0.b32.cont [11/16] 0.0, 128
        %574 = vxpose.xlu0.b32.cont [12/16] 0.0, 128
        %575 = vxpose.xlu0.b32.cont [13/16] 0.0, 128
        %576 = vxpose.xlu0.b32.cont [14/16] 0.0, 128
        %577 = vxpose.xlu0.b32.cont [15/16] 0.0, 128
        %578 = vxpose.xlu0.b32.end [16/16] 0.0, 128
        %v579 = vpop.trf.xlu0
        %v580 = vpop.trf.xlu0
        %v581 = vpop.trf.xlu0
        %v582 = vpop.trf.xlu0
        %v583 = vpop.trf.xlu0
        %v584 = vpop.trf.xlu0
        %v585 = vpop.trf.xlu0
        %v586 = vpop.trf.xlu0
        %v587 = vpop.trf.xlu0
        %v588 = vpop.trf.xlu0
        %v589 = vpop.trf.xlu0
        %v590 = vpop.trf.xlu0
        %v591 = vpop.trf.xlu0
        %v592 = vpop.trf.xlu0
        %v593 = vpop.trf.xlu0
        %v594 = vpop.trf.xlu0
        %595 = vst.msk [vmem:[#allocation3] sm:$0xff] %vm236, %v579
        %596 = vst.msk [vmem:[#allocation3 + $0x8] sm:$0xff] %vm236, %v580
        %v597 = vld [vmem:[#allocation3] ss:$2 sm:$0xff]
        %s598 = scalar_lea.vmem %s164, 96
        %599 = vst.msk [vmem:[%s598] sm:$0xff] %vm236, %v597
        %v600 = vld [vmem:[%s241] ss:$2 sm:$0xff]
        %s601 = scalar_lea.vmem %s164, 112
        %602 = vst.msk [vmem:[%s601] sm:$0xff] %vm236, %v600
        %v603 = vld [vmem:[%s245] ss:$2 sm:$0xff]
        %604 = vxpose.xlu0.b32.start [1/16] %v603, 128
        %605 = vxpose.xlu0.b32.cont [2/16] 0.0, 128
        %606 = vxpose.xlu0.b32.cont [3/16] 0.0, 128
        %607 = vxpose.xlu0.b32.cont [4/16] 0.0, 128
        %608 = vxpose.xlu0.b32.cont [5/16] 0.0, 128
        %609 = vxpose.xlu0.b32.cont [6/16] 0.0, 128
        %610 = vxpose.xlu0.b32.cont [7/16] 0.0, 128
        %611 = vxpose.xlu0.b32.cont [8/16] 0.0, 128
        %612 = vxpose.xlu0.b32.cont [9/16] 0.0, 128
        %613 = vxpose.xlu0.b32.cont [10/16] 0.0, 128
        %614 = vxpose.xlu0.b32.cont [11/16] 0.0, 128
        %615 = vxpose.xlu0.b32.cont [12/16] 0.0, 128
        %616 = vxpose.xlu0.b32.cont [13/16] 0.0, 128
        %617 = vxpose.xlu0.b32.cont [14/16] 0.0, 128
        %618 = vxpose.xlu0.b32.cont [15/16] 0.0, 128
        %619 = vxpose.xlu0.b32.end [16/16] 0.0, 128
        %v620 = vpop.trf.xlu0
        %v621 = vpop.trf.xlu0
        %v622 = vpop.trf.xlu0
        %v623 = vpop.trf.xlu0
        %v624 = vpop.trf.xlu0
        %v625 = vpop.trf.xlu0
        %v626 = vpop.trf.xlu0
        %v627 = vpop.trf.xlu0
        %v628 = vpop.trf.xlu0
        %v629 = vpop.trf.xlu0
        %v630 = vpop.trf.xlu0
        %v631 = vpop.trf.xlu0
        %v632 = vpop.trf.xlu0
        %v633 = vpop.trf.xlu0
        %v634 = vpop.trf.xlu0
        %v635 = vpop.trf.xlu0
        %636 = vst.msk [vmem:[#allocation3] sm:$0xff] %vm236, %v620
        %637 = vst.msk [vmem:[#allocation3 + $0x8] sm:$0xff] %vm236, %v621
        %v638 = vld [vmem:[#allocation3] ss:$2 sm:$0xff]
        %s639 = scalar_lea.vmem %s164, 104
        %640 = vst.msk [vmem:[%s639] sm:$0xff] %vm236, %v638
        %v641 = vld [vmem:[%s241] ss:$2 sm:$0xff]
        %s642 = scalar_lea.vmem %s164, 120
        %643 = vst.msk [vmem:[%s642] sm:$0xff] %vm236, %v641
        %s644 = smul.u32 16, %s20
        %p645 = scmp.lt.s32.totalorder %s19, 1
        %s646 = scalar_select %p645, %s19, 1
        %p647 = scmp.lt.s32.totalorder %s644, 15
        %s648 = scalar_select %p647, %s644, 15
        %s649 = smul.addr %s646, 16
        %s650 = sadd.s32 %s648, %s649
        %s651 = smul.addr %s650, 8
        %s652 = scalar_lea.vmem %s1, %s651
        // Predicated region
        $region29: #{tpu_custom_call.1} parent=23 // pred_check
          %p653 = pneg %p75
        $region30: #{tpu_custom_call.1} parent=23 // pred_check_branch
          %655 = sbr.rel (%p653) target = $region32
        $region31: #{tpu_custom_call.1} parent=23 // pred_region
          %s656 = smul.u32 16, %s20
        $region32: #{tpu_custom_call.1} parent=23 // pred_fallthru
          _
      $region24: #{tpu_custom_call.1} parent=5 // pred_fallthru
        _
      %p657 = scmp.le.s32.totalorder 2, %s10
      // Predicated region
      $region33: #{tpu_custom_call.1} parent=5 // pred_check
        %p658 = pneg %p657
      $region34: #{tpu_custom_call.1} parent=5 // pred_check_branch
        %660 = sbr.rel (%p658) target = $region36
      $region35: #{tpu_custom_call.1} parent=5 // pred_region
        %s661 = ssub.s32 %s10, 2
        // Predicated region
        $region37: #{tpu_custom_call.1} parent=35 // pred_check
          %p662 = pneg %p81
        $region38: #{tpu_custom_call.1} parent=35 // pred_check_branch
          %664 = sbr.rel (%p662) target = $region40
        $region39: #{tpu_custom_call.1} parent=35 // pred_region
          %s665 = smul.u32 16, %s22
          %p666 = scmp.lt.s32.totalorder %s21, 1
          %s667 = scalar_select %p666, %s21, 1
          %p668 = scmp.lt.s32.totalorder %s665, 15
          %s669 = scalar_select %p668, %s665, 15
          %s670 = smul.addr %s667, 16
          %s671 = sadd.s32 %s669, %s670
          %s672 = smul.addr %s671, 8
          %s673 = scalar_lea.vmem %s1, %s672
        $region40: #{tpu_custom_call.1} parent=35 // pred_fallthru
          _
      $region36: #{tpu_custom_call.1} parent=5 // pred_fallthru
        _
    $region6: #{tpu_custom_call.1} parent=1 // loop_footer
      %s14 = sadd.s32 1, %s10
    $region7: #{tpu_custom_call.1} parent=1 // loop_footer_branch
      %9 = sbr.rel target = $region3
    $region8: #{tpu_custom_call.1} parent=1 // loop_exit
      _
    %674 = vsyncpa [#allocation5], 1
    %s675 = scalar_lea.sflag [#allocation5], 1
    %676 = vsyncpa %s675, 1

</llo_original>
